<compile_context>
chip_gen: v5e
topology: v5e:2x2
jax: 0.10.0
libtpu: 0.0.40
codegen_flags: <defaults>
</compile_context>

<pallas_src>
import functools

import jax
import jax.numpy as jnp
from jax import lax
from jax.experimental import pallas as pl
from jax.experimental.pallas import tpu as pltpu


def _round_up(n, m):
    return (n + m - 1) // m * m


def _mlp_kernel(x_ref, w1_ref, b1_ref, w2_ref, b2_ref, oT_ref, *, compute_dtype):
    x = x_ref[...]            # [tb, xdim]   native PyTorch activation layout
    w1 = w1_ref[...]          # [hdim, xdim] PyTorch nn.Linear weight layout
    w2 = w2_ref[...]          # [udim, hdim]
    if compute_dtype is not None:
        # In-kernel cast: hidden under the DMA, no extra HBM pass.
        x = x.astype(compute_dtype)
        w1 = w1.astype(compute_dtype)
        w2 = w2.astype(compute_dtype)
    # hT = W1 @ x^T : contract axis 1 of both operands -> [hdim, tb] lane-dense.
    h = lax.dot_general(w1, x, (((1,), (1,)), ((), ())),
                        preferred_element_type=jnp.float32)
    h = jnp.maximum(h + b1_ref[...], 0.0)          # bias broadcast over lanes
    # outT = W2 @ hT + b2 -> [udim, tb]
    out = jnp.dot(w2, h.astype(w2.dtype), preferred_element_type=jnp.float32)
    oT_ref[...] = (out + b2_ref[...]).astype(oT_ref.dtype)


@functools.partial(jax.jit,
                   static_argnames=("block_b", "compute_dtype", "transposed_output"))
def q_t_forward(x, w1, b1, w2, b2, *, block_b=131072, compute_dtype=None,
                transposed_output=False):
    """Pallas forward of q_t: Linear(xdim,hdim) -> ReLU -> Linear(hdim,udim).

    x  : [B, xdim] float32 (native PyTorch layout, no transpose needed)
    w1 : [hdim, xdim], b1 : [hdim], w2 : [udim, hdim], b2 : [udim]
    block_b          : batch-tile size on the lane axis (rounded to 128).
    compute_dtype    : e.g. jnp.bfloat16 for the MXU-native path (f32 accum).
    transposed_output: True -> return the lane-dense [udim, B] slab (lets the
                       consumer fuse away the final transpose).
    returns [B, udim] float32 (or [udim, B] if transposed_output).
    """
    B, xdim = x.shape
    hdim = w1.shape[0]
    udim = w2.shape[0]

    # ---- batch tiling (lane axis of the transposed intermediate) -----------
    tb = min(_round_up(block_b, 128), 512 * 1024)
    if B >= 2 * 128:
        # At least 2 grid steps so v7x's two TensorCores both get work and the
        # software pipeline has something to overlap.
        tb = min(tb, _round_up(pl.cdiv(B, 2), 128))
    if tb >= B:
        tb = B                       # single full-array block (always legal)
    grid = (pl.cdiv(B, tb),)         # ragged last tile handled by Pallas

    # Biases as column vectors so they broadcast over lanes (tiny, fuses in jit).
    b1c = b1.reshape(hdim, 1).astype(jnp.float32)
    b2c = b2.reshape(udim, 1).astype(jnp.float32)

    # VMEM: double-buffered x & out tiles + resident weights, with headroom
    # (v5e scoped default is only 16 MiB).
    x_bytes = jnp.dtype(x.dtype).itemsize
    vmem_need = (2 * tb * (xdim * x_bytes + udim * 4)
                 + (hdim * xdim + udim * hdim + hdim + udim) * 4)
    vmem_limit = int(min(48 * 1024 * 1024,
                         max(32 * 1024 * 1024, vmem_need + (2 << 20))))

    cost = pl.CostEstimate(
        flops=2 * B * (xdim * hdim + hdim * udim),
        transcendentals=0,
        bytes_accessed=B * (xdim * x_bytes + udim * 4)
        + (hdim * xdim + udim * hdim + hdim + udim) * 4,
    )

    outT = pl.pallas_call(
        functools.partial(_mlp_kernel, compute_dtype=compute_dtype),
        out_shape=jax.ShapeDtypeStruct((udim, B), jnp.float32),
        grid=grid,
        in_specs=[
            pl.BlockSpec((tb, xdim), lambda i: (i, 0)),    # x tile, native layout
            pl.BlockSpec((hdim, xdim), lambda i: (0, 0)),  # W1 resident
            pl.BlockSpec((hdim, 1), lambda i: (0, 0)),     # b1 resident
            pl.BlockSpec((udim, hdim), lambda i: (0, 0)),  # W2 resident
            pl.BlockSpec((udim, 1), lambda i: (0, 0)),     # b2 resident
        ],
        out_specs=pl.BlockSpec((udim, tb), lambda i: (0, i)),  # lane-dense out
        compiler_params=pltpu.CompilerParams(
            dimension_semantics=("parallel",),
            vmem_limit_bytes=vmem_limit,
        ),
        cost_estimate=cost,
    )(x, w1, b1c, w2, b2c)

    if transposed_output:
        return outT              # [udim, B] lane-dense slab
    return outT.T                # [B, udim] (PyTorch orientation, fused in jit)


def init_params(key, xdim, udim, hdim=16):
    """Deterministic init mimicking nn.Linear defaults (uniform +-1/sqrt(fan_in)),
    in PyTorch weight layout ([out_features, in_features])."""
    k1, k2, k3, k4 = jax.random.split(key, 4)
    lim1 = 1.0 / jnp.sqrt(xdim)
    lim2 = 1.0 / jnp.sqrt(hdim)
    w1 = jax.random.uniform(k1, (hdim, xdim), jnp.float32, -lim1, lim1)
    b1 = jax.random.uniform(k2, (hdim,), jnp.float32, -lim1, lim1)
    w2 = jax.random.uniform(k3, (udim, hdim), jnp.float32, -lim2, lim2)
    b2 = jax.random.uniform(k4, (udim,), jnp.float32, -lim2, lim2)
    return w1, b1, w2, b2


def _reference(x, w1, b1, w2, b2):
    return jnp.maximum(x @ w1.T + b1, 0.0) @ w2.T + b2


if __name__ == "__main__":
    key = jax.random.PRNGKey(0)
    k_x, k_x2, k_p = jax.random.split(key, 3)

    B, xdim, udim, hdim = 8, 4, 2, 16  # small shapes consistent with q_t(xdim, udim)
    w1, b1, w2, b2 = init_params(k_p, xdim, udim, hdim)

    # 1) tiny batch (single full block)
    x = jax.random.normal(k_x, (B, xdim), jnp.float32)
    out = jax.block_until_ready(q_t_forward(x, w1, b1, w2, b2))
    ref = _reference(x, w1, b1, w2, b2)
    assert out.shape == (B, udim)
    assert jnp.allclose(out, ref, atol=1e-5, rtol=1e-5)

    # 2) ragged batch across >= 2 grid tiles (exercises pipeline + masked stores)
    B2 = 300
    x2 = jax.random.normal(k_x2, (B2, xdim), jnp.float32)
    out2 = jax.block_until_ready(q_t_forward(x2, w1, b1, w2, b2))
    ref2 = _reference(x2, w1, b1, w2, b2)
    assert out2.shape == (B2, udim)
    assert jnp.allclose(out2, ref2, atol=1e-5, rtol=1e-5)

    # 3) lane-dense transposed slab output (consumer-side fusion path)
    out_t = jax.block_until_ready(
        q_t_forward(x2, w1, b1, w2, b2, transposed_output=True))
    assert out_t.shape == (udim, B2)
    assert jnp.allclose(out_t.T, ref2, atol=1e-5, rtol=1e-5)

    # 4) bf16 MXU path (in-kernel cast, f32 accumulation), looser tolerance
    out_bf = jax.block_until_ready(
        q_t_forward(x2, w1, b1, w2, b2, compute_dtype=jnp.bfloat16))
    assert jnp.allclose(out_bf, ref2, atol=5e-2, rtol=5e-2)

    print("KERNEL_OK")
</pallas_src>

<mosaic_0001>
module attributes {stable_mosaic.version = 11 : i64} {
  func.func @_mlp_kernel(%arg0: i32, %arg1: memref<8x4xf32, #tpu.memory_space<vmem>>, %arg2: memref<16x4xf32, #tpu.memory_space<vmem>>, %arg3: memref<16x1xf32, #tpu.memory_space<vmem>>, %arg4: memref<2x16xf32, #tpu.memory_space<vmem>>, %arg5: memref<2x1xf32, #tpu.memory_space<vmem>>, %arg6: memref<2x8xf32, #tpu.memory_space<vmem>>) attributes {dimension_semantics = [#tpu.dimension_semantics<parallel>], iteration_bounds = array<i64: 1>, scalar_prefetch = 0 : i64, scratch_operands = 0 : i64, tpu.core_type = #tpu.core_type<tc>, window_params = [{transform_indices = @transform_0, window_bounds = array<i64: 8, 4>}, {pipeline_mode = #tpu.pipeline_mode<synchronous>, transform_indices = @transform_1, window_bounds = array<i64: 16, 4>}, {pipeline_mode = #tpu.pipeline_mode<synchronous>, transform_indices = @transform_2, window_bounds = array<i64: 16, 1>}, {pipeline_mode = #tpu.pipeline_mode<synchronous>, transform_indices = @transform_3, window_bounds = array<i64: 2, 16>}, {pipeline_mode = #tpu.pipeline_mode<synchronous>, transform_indices = @transform_4, window_bounds = array<i64: 2, 1>}, {transform_indices = @transform_5, window_bounds = array<i64: 2, 8>}]} {
    %c0 = arith.constant 0 : index
    %c0_0 = arith.constant 0 : index
    %0 = vector.load %arg1[%c0, %c0_0] : memref<8x4xf32, #tpu.memory_space<vmem>>, vector<8x4xf32>
    %c0_1 = arith.constant 0 : index
    %c0_2 = arith.constant 0 : index
    %1 = vector.load %arg2[%c0_1, %c0_2] : memref<16x4xf32, #tpu.memory_space<vmem>>, vector<16x4xf32>
    %c0_3 = arith.constant 0 : index
    %c0_4 = arith.constant 0 : index
    %2 = vector.load %arg4[%c0_3, %c0_4] : memref<2x16xf32, #tpu.memory_space<vmem>>, vector<2x16xf32>
    %cst = arith.constant dense<0.000000e+00> : vector<16x8xf32>
    %3 = tpu.matmul %1, %0, %cst {dimension_numbers = #tpu.dot_dimension_numbers<[1], [1], [0], [0], [0, 0, 1, 0], [], []>} : vector<16x4xf32>, vector<8x4xf32>, vector<16x8xf32> -> vector<16x8xf32>
    %c0_5 = arith.constant 0 : index
    %c0_6 = arith.constant 0 : index
    %4 = vector.load %arg3[%c0_5, %c0_6] : memref<16x1xf32, #tpu.memory_space<vmem>>, vector<16x1xf32>
    %5 = vector.broadcast %4 : vector<16x1xf32> to vector<16x8xf32>
    %6 = arith.addf %3, %5 : vector<16x8xf32>
    %cst_7 = arith.constant 0.000000e+00 : f32
    %7 = vector.broadcast %cst_7 : f32 to vector<16x8xf32>
    %8 = arith.maximumf %6, %7 : vector<16x8xf32>
    %cst_8 = arith.constant dense<0.000000e+00> : vector<2x8xf32>
    %9 = tpu.matmul %2, %8, %cst_8 {dimension_numbers = #tpu.dot_dimension_numbers<[1], [0], [0], [1], [0, 0, 1, 1], [], []>} : vector<2x16xf32>, vector<16x8xf32>, vector<2x8xf32> -> vector<2x8xf32>
    %c0_9 = arith.constant 0 : index
    %c0_10 = arith.constant 0 : index
    %10 = vector.load %arg5[%c0_9, %c0_10] : memref<2x1xf32, #tpu.memory_space<vmem>>, vector<2x1xf32>
    %11 = vector.broadcast %10 : vector<2x1xf32> to vector<2x8xf32>
    %12 = arith.addf %9, %11 : vector<2x8xf32>
    %c0_11 = arith.constant 0 : index
    %c0_12 = arith.constant 0 : index
    %13 = vector.load %arg6[%c0_11, %c0_12] : memref<2x8xf32, #tpu.memory_space<vmem>>, vector<2x8xf32>
    tpu.vector_store %arg6[%c0_11, %c0_12], %12 {strides = array<i32>} : memref<2x8xf32, #tpu.memory_space<vmem>>, vector<2x8xf32>,
    return
  }
  func.func @transform_0(%arg0: i32) -> (i32, i32) {
    %c0_i32 = arith.constant 0 : i32
    %c0_i32_0 = arith.constant 0 : i32
    return %arg0, %c0_i32 : i32, i32
  }
  func.func @transform_1(%arg0: i32) -> (i32, i32) {
    %c0_i32 = arith.constant 0 : i32
    %c0_i32_0 = arith.constant 0 : i32
    %c0_i32_1 = arith.constant 0 : i32
    return %c0_i32, %c0_i32_0 : i32, i32
  }
  func.func @transform_2(%arg0: i32) -> (i32, i32) {
    %c0_i32 = arith.constant 0 : i32
    %c0_i32_0 = arith.constant 0 : i32
    %c0_i32_1 = arith.constant 0 : i32
    return %c0_i32, %c0_i32_0 : i32, i32
  }
  func.func @transform_3(%arg0: i32) -> (i32, i32) {
    %c0_i32 = arith.constant 0 : i32
    %c0_i32_0 = arith.constant 0 : i32
    %c0_i32_1 = arith.constant 0 : i32
    return %c0_i32, %c0_i32_0 : i32, i32
  }
  func.func @transform_4(%arg0: i32) -> (i32, i32) {
    %c0_i32 = arith.constant 0 : i32
    %c0_i32_0 = arith.constant 0 : i32
    %c0_i32_1 = arith.constant 0 : i32
    return %c0_i32, %c0_i32_0 : i32, i32
  }
  func.func @transform_5(%arg0: i32) -> (i32, i32) {
    %c0_i32 = arith.constant 0 : i32
    %c0_i32_0 = arith.constant 0 : i32
    return %c0_i32, %arg0 : i32, i32
  }
}

</mosaic_0001>

<llo_original>
// kernel: q_t_forward.1
$region0: #{q_t_forward.1}
  #allocation0 [shape = 'u32[]', space=smem, size = 0x4, offset = 0x4, fixed_abs, tag = 'smem constant byte address 0x4 - core index']
  #allocation1 [shape = 'u32[72,128]{1,0:T(1,128)}', space=vmem, size = 0x9000, scoped, tag = 'internal scratch']
  %s0 = inlined_call_operand.vmem [shape: f32[8,4], index: 0, kind: input, shape index: {}]
  %s1 = inlined_call_operand.vmem [shape: f32[16,4], index: 1, kind: input, shape index: {}]
  %s2 = inlined_call_operand.vmem [shape: f32[16,1], index: 2, kind: input, shape index: {}]
  %s3 = inlined_call_operand.vmem [shape: f32[2,16], index: 3, kind: input, shape index: {}]
  %s4 = inlined_call_operand.vmem [shape: f32[2,1], index: 4, kind: input, shape index: {}]
  %s5 = inlined_call_operand.hbm [shape: f32[2,8], index: 5, kind: output, shape index: {}]
  %s6 = sld [smem:[#allocation0]]
  $region30: #{q_t_forward.1} parent=0
    _
  %s8 = ssub.s32 1, %s6
  %s9 = scalar_select 0, %s8, %s6
  $region1: #{q_t_forward.1} parent=0
    #allocation2 [shape = 'u8[1024]{0}', space=vmem, size = 0x400, scoped, tag = 'output window, operand 0, single buffered']
    #allocation3 [shape = 's32[1]{0}', space=sflag, size = 0x4, scoped, tag = 'scoped memory for q_t_forward.1']
    %10 = vsyncpa [#allocation3], 0
    // Predicated region
    $region2: #{q_t_forward.1} parent=1 // pred_check
      _
    $region3: #{q_t_forward.1} parent=1 // pred_check_branch
      %12 = sbr.rel (0) target = $region5
    $region4: #{q_t_forward.1} parent=1 // pred_region
      _
    $region5: #{q_t_forward.1} parent=1 // pred_fallthru
      _
    // Predicated region
    $region6: #{q_t_forward.1} parent=1 // pred_check
      _
    $region7: #{q_t_forward.1} parent=1 // pred_check_branch
      %14 = sbr.rel (0) target = $region9
    $region8: #{q_t_forward.1} parent=1 // pred_region
      _
    $region9: #{q_t_forward.1} parent=1 // pred_fallthru
      _
    // Predicated region
    $region10: #{q_t_forward.1} parent=1 // pred_check
      _
    $region11: #{q_t_forward.1} parent=1 // pred_check_branch
      %16 = sbr.rel (0) target = $region13
    $region12: #{q_t_forward.1} parent=1 // pred_region
      _
    $region13: #{q_t_forward.1} parent=1 // pred_fallthru
      _
    // Predicated region
    $region14: #{q_t_forward.1} parent=1 // pred_check
      _
    $region15: #{q_t_forward.1} parent=1 // pred_check_branch
      %18 = sbr.rel (0) target = $region17
    $region16: #{q_t_forward.1} parent=1 // pred_region
      _
    $region17: #{q_t_forward.1} parent=1 // pred_fallthru
      _
    // Predicated region
    $region18: #{q_t_forward.1} parent=1 // pred_check
      _
    $region19: #{q_t_forward.1} parent=1 // pred_check_branch
      %20 = sbr.rel (0) target = $region21
    $region20: #{q_t_forward.1} parent=1 // pred_region
      _
    $region21: #{q_t_forward.1} parent=1 // pred_fallthru
      _
    %v21 = vld [vmem:[%s0] sm:$0xff]
    %v22 = vld [vmem:[%s1] sm:$0xff]
    %v23 = vld [vmem:[%s1 + $0x8] sm:$0xff]
    %v24 = vld [vmem:[%s3] sm:$0x3]
    %v25 = vld [vmem:[%s2] sm:$0xff]
    %v26 = vld [vmem:[%s2 + $0x8] sm:$0xff]
    %28 = vset.pattern.permute.xlu0 0
    %29 = vperm.xlu0 %28, %v25
    %v30 = vpop.permute.xlu0 %29
    %33 = vset.pattern.permute.xlu0 0
    %34 = vperm.xlu0 %33, %v26
    %v35 = vpop.permute.xlu0 %34
    %vm37 = vcmask 31744
    %v39 = vsel %vm37, %v22, 0
    %v42 = vsel %vm37, %v23, 0
    %v45 = vsel %vm37, %v21, 0
    %47 = vmatpush.xpose.msra.mxu0 0.0
    %48 = vmatpush.xpose.msra.mxu0 0.0
    %49 = vmatpush.xpose.msra.mxu0 0.0
    %50 = vmatpush.xpose.msra.mxu0 0.0
    %51 = vmatpush.xpose.msra.mxu0 0.0
    %52 = vmatpush.xpose.msra.mxu0 0.0
    %53 = vmatpush.xpose.msra.mxu0 0.0
    %54 = vmatpush.xpose.msra.mxu0 0.0
    %55 = vmatpush.xpose.msra.mxu0 0.0
    %56 = vmatpush.xpose.msra.mxu0 0.0
    %57 = vmatpush.xpose.msra.mxu0 0.0
    %58 = vmatpush.xpose.msra.mxu0 0.0
    %59 = vmatpush.xpose.msra.mxu0 0.0
    %60 = vmatpush.xpose.msra.mxu0 0.0
    %61 = vmatpush.xpose.msra.mxu0 0.0
    %62 = vmatpush.xpose.msra.mxu0 %v45
    %63 = vmatmul.f32.gmra.mxu0 %v39
    %v64 = vpop.f32.mrf.mxu0
    %v65 = vadd.f32 %v30, %v64
    %66 = vmatmul.f32.gmra.mxu0 %v42
    %v67 = vpop.f32.mrf.mxu0
    %v68 = vadd.f32 %v35, %v67
    %69 = vdwg.mxu0
    %v70 = vmax.f32 %v65, 0.0
    %v71 = vmax.f32 %v68, 0.0
    %v72 = vld [vmem:[%s4] sm:$0x3]
    %74 = vset.pattern.permute.xlu0 0
    %75 = vperm.xlu0 %74, %v72
    %v76 = vpop.permute.xlu0 %75
    %vm78 = vcmask 130048
    %v80 = vsel %vm78, %v24, 0
    %82 = vmatpush.msra.mxu0 0.0
    %83 = vmatpush.msra.mxu0 0.0
    %84 = vmatpush.msra.mxu0 0.0
    %85 = vmatpush.msra.mxu0 0.0
    %86 = vmatpush.msra.mxu0 0.0
    %87 = vmatpush.msra.mxu0 0.0
    %88 = vmatpush.msra.mxu0 0.0
    %89 = vmatpush.msra.mxu0 0.0
    %90 = vmatpush.msra.mxu0 0.0
    %91 = vmatpush.msra.mxu0 0.0
    %92 = vmatpush.msra.mxu0 0.0
    %93 = vmatpush.msra.mxu0 0.0
    %94 = vmatpush.msra.mxu0 0.0
    %95 = vmatpush.msra.mxu0 0.0
    %96 = vmatpush.msra.mxu0 %v71
    %97 = vmatpush.msra.mxu0 %v70
    %98 = vmatmul.f32.gmra.mxu0 %v80
    %v99 = vpop.f32.mrf.mxu0
    %v100 = vadd.f32 %v76, %v99
    %101 = vdwg.mxu0
    %vm102 = vcmask 58368
    %103 = vst.msk [vmem:[#allocation2] sm:$0x3] %vm102, %v100
    // Predicated region
    $region22: #{q_t_forward.1} parent=1 // pred_check
      _
    $region23: #{q_t_forward.1} parent=1 // pred_check_branch
      %105 = sbr.rel (0) target = $region25
    $region24: #{q_t_forward.1} parent=1 // pred_region
      %107 = vsyncadd [#allocation3], 0
      %s109 = sshll.u32 [#allocation2], 4
      %s110 = int_to_ptr.vmem [resolvable:$true] %s109
      %s111 = sshll.u32 %s5, 4
      %s112 = int_to_ptr.hbm [resolvable:$true] %s111
      %114 = dma.vmem_to_hbm [thread:$0]  %s110, 32, %s112, [#allocation3]
    $region25: #{q_t_forward.1} parent=1 // pred_fallthru
      _
    // Predicated region
    $region26: #{q_t_forward.1} parent=1 // pred_check
      _
    $region27: #{q_t_forward.1} parent=1 // pred_check_branch
      %116 = sbr.rel (0) target = $region29
    $region28: #{q_t_forward.1} parent=1 // pred_region
      %118 = dma.done [#allocation3], 32
    $region29: #{q_t_forward.1} parent=1 // pred_fallthru
      _
    %119 = vsyncpa [#allocation3], 1

</llo_original>
